<compile_context>
chip_gen: v7x
topology: tpu7x:2x2x1
jax: 0.10.0
libtpu: 0.0.40
codegen_flags: <defaults>
</compile_context>

<pallas_src>
import jax
import jax.numpy as jnp
from jax.experimental import pallas as pl
from jax.experimental.pallas import tpu as pltpu


def _round_up(v, m):
    return (v + m - 1) // m * m


def _pick_tile(padded_dim, candidates=(512, 256, 128)):
    # padded_dim is always a multiple of 128, so this terminates at 128.
    for c in candidates:
        if padded_dim % c == 0:
            return c
    return padded_dim


def _stacked_linear_kernel(x_ref, w_ref, b_ref, o_ref, acc_ref):
    # x_ref:   (Lb, Bp, tk)  bf16
    # w_ref:   (Lb, tk, tn)  bf16
    # b_ref:   (Lb, 1,  tn)  f32
    # o_ref:   (Lb, Bp, tn)  f32
    # acc_ref: (Lb, Bp, tn)  f32 scratch (persists across the K axis)
    k = pl.program_id(2)

    @pl.when(k == 0)
    def _():
        acc_ref[...] = jnp.zeros_like(acc_ref)

    # Batched (over the Lb stacked layers) MXU matmul, f32 accumulation.
    acc_ref[...] += jnp.einsum(
        "lbk,lkn->lbn",
        x_ref[...],
        w_ref[...],
        preferred_element_type=jnp.float32,
    )

    @pl.when(k == pl.num_programs(2) - 1)
    def _():
        o_ref[...] = (acc_ref[...] + b_ref[...]).astype(o_ref.dtype)


def stacked_module_forward(x, weights, biases):
    """Apply layer l's linear to x[l] and stack results.

    Args:
      x:       (L, B, D_in)
      weights: (L, D_in, D_out)   (transposed vs. torch's (D_out, D_in))
      biases:  (L, 1, D_out)

    Returns:
      (L, B, D_out) in x.dtype.  Matmul operands are rounded to bf16
      (accumulation stays f32), matching MXU-native precision.
    """
    L, B, D_in = x.shape
    D_out = weights.shape[-1]
    out_dtype = x.dtype

    # Lane/sublane-aligned padded sizes.
    Kp = _round_up(D_in, 128)
    Np = _round_up(D_out, 128)
    Bp = _round_up(B, 8)

    tk = _pick_tile(Kp)
    tn = _pick_tile(Np)

    # Layers per grid step (amortize step overhead), bounded by the f32
    # accumulator footprint.
    lb = min(L, 8)
    while lb > 1 and lb * Bp * tn * 4 > 4 * 1024 * 1024:
        lb //= 2
    Lp = _round_up(L, lb)

    # Pad + cast.  bf16 operands halve the streamed weight bytes and hit
    # MXU-native throughput; zero padding keeps the math exact.
    x_p = jnp.zeros((Lp, Bp, Kp), jnp.bfloat16).at[:L, :B, :D_in].set(
        x.astype(jnp.bfloat16))
    w_p = jnp.zeros((Lp, Kp, Np), jnp.bfloat16).at[:L, :D_in, :D_out].set(
        weights.astype(jnp.bfloat16))
    b_p = jnp.zeros((Lp, 1, Np), jnp.float32).at[:L, :, :D_out].set(
        biases.astype(jnp.float32))

    grid = (Lp // lb, Np // tn, Kp // tk)

    flops = 2 * L * B * D_in * D_out
    bytes_accessed = (x_p.size * 2 + w_p.size * 2 + b_p.size * 4
                      + Lp * Bp * Np * 4)

    # Per-step VMEM working set: double-buffered x/w/b/out tiles + accumulator.
    step_bytes = (2 * (lb * Bp * tk * 2 + lb * tk * tn * 2
                       + lb * tn * 4 + lb * Bp * tn * 4)
                  + lb * Bp * tn * 4)
    vmem_limit = int(min(64 * 2**20, max(32 * 2**20, 2 * step_bytes)))

    out_p = pl.pallas_call(
        _stacked_linear_kernel,
        out_shape=jax.ShapeDtypeStruct((Lp, Bp, Np), jnp.float32),
        grid_spec=pltpu.PrefetchScalarGridSpec(
            num_scalar_prefetch=0,
            grid=grid,
            in_specs=[
                # x tile: ignores the N axis (re-used across the inner N loop).
                pl.BlockSpec((lb, Bp, tk), lambda l, n, k: (l, 0, k)),
                # weight tile: streams over (K, N).
                pl.BlockSpec((lb, tk, tn), lambda l, n, k: (l, k, n)),
                # bias tile: ignores K -> only DMA'd when (l, n) changes.
                pl.BlockSpec((lb, 1, tn), lambda l, n, k: (l, 0, n)),
            ],
            out_specs=pl.BlockSpec((lb, Bp, tn), lambda l, n, k: (l, 0, n)),
            scratch_shapes=[pltpu.VMEM((lb, Bp, tn), jnp.float32)],
        ),
        compiler_params=pltpu.CompilerParams(
            dimension_semantics=("parallel", "parallel", "arbitrary"),
            vmem_limit_bytes=vmem_limit,
        ),
        cost_estimate=pl.CostEstimate(
            flops=flops, transcendentals=0, bytes_accessed=bytes_accessed),
    )(x_p, w_p, b_p)

    return out_p[:L, :B, :D_out].astype(out_dtype)


if __name__ == "__main__":
    # Small shapes: L stacked layers of Linear(D_in -> D_out)
    L, B, D_in, D_out = 4, 8, 32, 32

    key = jax.random.PRNGKey(0)
    kx, kw, kb = jax.random.split(key, 3)

    x = jax.random.normal(kx, (L, B, D_in), dtype=jnp.float32)
    # Deterministic synthetic params (shapes mirror L x nn.Linear(D_in, D_out)).
    weights = jax.random.normal(kw, (L, D_in, D_out), dtype=jnp.float32) * 0.05
    biases = jax.random.normal(kb, (L, 1, D_out), dtype=jnp.float32) * 0.05

    out = jax.block_until_ready(stacked_module_forward(x, weights, biases))

    # Reference at the kernel's precision: bf16 operands, f32 accumulation.
    x_bf = x.astype(jnp.bfloat16).astype(jnp.float32)
    w_bf = weights.astype(jnp.bfloat16).astype(jnp.float32)
    ref = jnp.einsum("lbi,lio->lbo", x_bf, w_bf) + biases

    assert out.shape == (L, B, D_out)
    assert jnp.allclose(out, ref, atol=2e-3, rtol=2e-3), float(
        jnp.max(jnp.abs(out - ref)))

    print("KERNEL_OK")
</pallas_src>

<mosaic_0001>
module attributes {stable_mosaic.version = 11 : i64} {
  func.func @_stacked_linear_kernel(%arg0: i32, %arg1: i32, %arg2: i32, %arg3: memref<4x8x128xbf16, #tpu.memory_space<vmem>>, %arg4: memref<4x128x128xbf16, #tpu.memory_space<vmem>>, %arg5: memref<4x1x128xf32, #tpu.memory_space<vmem>>, %arg6: memref<4x8x128xf32, #tpu.memory_space<vmem>>, %arg7: memref<4x8x128xf32, #tpu.memory_space<vmem>>) attributes {dimension_semantics = [#tpu.dimension_semantics<parallel>, #tpu.dimension_semantics<parallel>, #tpu.dimension_semantics<arbitrary>], iteration_bounds = array<i64: 1, 1, 1>, scalar_prefetch = 0 : i64, scratch_operands = 1 : i64, tpu.core_type = #tpu.core_type<tc>, window_params = [{transform_indices = @transform_0, window_bounds = array<i64: 4, 8, 128>}, {transform_indices = @transform_1, window_bounds = array<i64: 4, 128, 128>}, {transform_indices = @transform_2, window_bounds = array<i64: 4, 1, 128>}, {transform_indices = @transform_3, window_bounds = array<i64: 4, 8, 128>}]} {
    %c0_i32 = arith.constant 0 : i32
    %0 = arith.cmpi eq, %arg2, %c0_i32 : i32
    %1 = arith.extui %0 : i1 to i32
    %c0_i32_0 = arith.constant 0 : i32
    %2 = arith.cmpi ne, %1, %c0_i32_0 : i32
    scf.if %2 {
      %cst_14 = arith.constant 0.000000e+00 : f32
      %12 = vector.broadcast %cst_14 : f32 to vector<4x8x128xf32>
      %c0_15 = arith.constant 0 : index
      %c0_16 = arith.constant 0 : index
      %c0_17 = arith.constant 0 : index
      %13 = vector.load %arg7[%c0_15, %c0_16, %c0_17] : memref<4x8x128xf32, #tpu.memory_space<vmem>>, vector<4x8x128xf32>
      tpu.vector_store %arg7[%c0_15, %c0_16, %c0_17], %12 {strides = array<i32>} : memref<4x8x128xf32, #tpu.memory_space<vmem>>, vector<4x8x128xf32>,
    } else {
    }
    %c0 = arith.constant 0 : index
    %c0_1 = arith.constant 0 : index
    %c0_2 = arith.constant 0 : index
    %3 = vector.load %arg7[%c0, %c0_1, %c0_2] : memref<4x8x128xf32, #tpu.memory_space<vmem>>, vector<4x8x128xf32>
    %c0_3 = arith.constant 0 : index
    %c0_4 = arith.constant 0 : index
    %c0_5 = arith.constant 0 : index
    %4 = vector.load %arg3[%c0_3, %c0_4, %c0_5] : memref<4x8x128xbf16, #tpu.memory_space<vmem>>, vector<4x8x128xbf16>
    %c0_6 = arith.constant 0 : index
    %c0_7 = arith.constant 0 : index
    %c0_8 = arith.constant 0 : index
    %5 = vector.load %arg4[%c0_6, %c0_7, %c0_8] : memref<4x128x128xbf16, #tpu.memory_space<vmem>>, vector<4x128x128xbf16>
    "tpu.trace_start"() <{level = 10 : i32, message = "lbk,lkn->lbn"}> : () -> ()
    %cst = arith.constant dense<0.000000e+00> : vector<4x8x128xf32>
    %6 = tpu.matmul %4, %5, %cst {dimension_numbers = #tpu.dot_dimension_numbers<[2], [1], [1], [2], [0, 0, 0, 1, 1, 2], [0], [0]>} : vector<4x8x128xbf16>, vector<4x128x128xbf16>, vector<4x8x128xf32> -> vector<4x8x128xf32>
    "tpu.trace_stop"() : () -> ()
    %7 = arith.addf %3, %6 : vector<4x8x128xf32>
    %c0_9 = arith.constant 0 : index
    %c0_10 = arith.constant 0 : index
    %c0_11 = arith.constant 0 : index
    %8 = vector.load %arg7[%c0_9, %c0_10, %c0_11] : memref<4x8x128xf32, #tpu.memory_space<vmem>>, vector<4x8x128xf32>
    tpu.vector_store %arg7[%c0_9, %c0_10, %c0_11], %7 {strides = array<i32>} : memref<4x8x128xf32, #tpu.memory_space<vmem>>, vector<4x8x128xf32>,
    %c0_i32_12 = arith.constant 0 : i32
    %9 = arith.cmpi eq, %arg2, %c0_i32_12 : i32
    %10 = arith.extui %9 : i1 to i32
    %c0_i32_13 = arith.constant 0 : i32
    %11 = arith.cmpi ne, %10, %c0_i32_13 : i32
    scf.if %11 {
      %c0_14 = arith.constant 0 : index
      %c0_15 = arith.constant 0 : index
      %c0_16 = arith.constant 0 : index
      %12 = vector.load %arg7[%c0_14, %c0_15, %c0_16] : memref<4x8x128xf32, #tpu.memory_space<vmem>>, vector<4x8x128xf32>
      %c0_17 = arith.constant 0 : index
      %c0_18 = arith.constant 0 : index
      %c0_19 = arith.constant 0 : index
      %13 = vector.load %arg5[%c0_17, %c0_18, %c0_19] : memref<4x1x128xf32, #tpu.memory_space<vmem>>, vector<4x1x128xf32>
      %14 = vector.broadcast %13 : vector<4x1x128xf32> to vector<4x8x128xf32>
      %15 = arith.addf %12, %14 : vector<4x8x128xf32>
      %c0_20 = arith.constant 0 : index
      %c0_21 = arith.constant 0 : index
      %c0_22 = arith.constant 0 : index
      %16 = vector.load %arg6[%c0_20, %c0_21, %c0_22] : memref<4x8x128xf32, #tpu.memory_space<vmem>>, vector<4x8x128xf32>
      tpu.vector_store %arg6[%c0_20, %c0_21, %c0_22], %15 {strides = array<i32>} : memref<4x8x128xf32, #tpu.memory_space<vmem>>, vector<4x8x128xf32>,
    } else {
    }
    return
  }
  func.func @transform_0(%arg0: i32, %arg1: i32, %arg2: i32) -> (i32, i32, i32) {
    %c0_i32 = arith.constant 0 : i32
    %c0_i32_0 = arith.constant 0 : i32
    return %arg0, %c0_i32, %arg2 : i32, i32, i32
  }
  func.func @transform_1(%arg0: i32, %arg1: i32, %arg2: i32) -> (i32, i32, i32) {
    %c0_i32 = arith.constant 0 : i32
    return %arg0, %arg2, %arg1 : i32, i32, i32
  }
  func.func @transform_2(%arg0: i32, %arg1: i32, %arg2: i32) -> (i32, i32, i32) {
    %c0_i32 = arith.constant 0 : i32
    %c0_i32_0 = arith.constant 0 : i32
    return %arg0, %c0_i32, %arg1 : i32, i32, i32
  }
  func.func @transform_3(%arg0: i32, %arg1: i32, %arg2: i32) -> (i32, i32, i32) {
    %c0_i32 = arith.constant 0 : i32
    %c0_i32_0 = arith.constant 0 : i32
    return %arg0, %c0_i32, %arg1 : i32, i32, i32
  }
}

</mosaic_0001>

<llo_original>
// kernel: tpu_custom_call.1
$region0: #{tpu_custom_call.1}
  #allocation0 [shape = 'u32[]', space=smem, size = 0x4, offset = 0x4, fixed_abs, tag = 'smem constant byte address 0x4 - core index']
  #allocation1 [shape = 'u32[144,128]{1,0:T(1,128)}', space=vmem, size = 0x12000, scoped, tag = 'internal scratch']
  #allocation2 [shape = 'f32[4,8,128]{2,1,0:T(8,128)}', space=vmem, size = 0x4000, scoped, tag = 'scratch operand']
  %s0 = inlined_call_operand.hbm [shape: bf16[4,8,128], index: 0, kind: input, shape index: {}]
  %s1 = inlined_call_operand.hbm [shape: bf16[4,128,128], index: 1, kind: input, shape index: {}]
  %s2 = inlined_call_operand.vmem [shape: f32[4,1,128], index: 2, kind: input, shape index: {}]
  %s3 = inlined_call_operand.hbm [shape: f32[4,8,128], index: 3, kind: output, shape index: {}]
  %s4 = sld [smem:[#allocation0]]
  $region38: #{tpu_custom_call.1} parent=0
    _
  %s6 = ssub.s32 1, %s4
  %s7 = scalar_select 0, %s6, %s4
  $region1: #{tpu_custom_call.1} parent=0
    #allocation3 [shape = 'u8[8192]{0}', space=vmem, size = 0x2000, scoped, tag = 'input window, operand 0, single buffered']
    #allocation4 [shape = 's32[1]{0}', space=sflag, size = 0x4, scoped, tag = 'scoped memory for tpu_custom_call.1']
    #allocation5 [shape = 's32[1]{0}', space=sflag, size = 0x4, scoped, tag = 'scoped memory for tpu_custom_call.1']
    #allocation6 [shape = 'u8[131072]{0}', space=vmem, size = 0x20000, scoped, tag = 'input window, operand 1, single buffered']
    #allocation7 [shape = 's32[1]{0}', space=sflag, size = 0x4, scoped, tag = 'scoped memory for tpu_custom_call.1']
    #allocation8 [shape = 'u8[16384]{0}', space=vmem, size = 0x4000, scoped, tag = 'output window, operand 0, single buffered']
    %8 = vsyncpa [#allocation4], 0
    %9 = vsyncpa [#allocation7], 0
    %10 = vsyncpa [#allocation5], 0
    // Predicated region
    $region2: #{tpu_custom_call.1} parent=1 // pred_check
      _
    $region3: #{tpu_custom_call.1} parent=1 // pred_check_branch
      %12 = sbr.rel (0) target = $region5
    $region4: #{tpu_custom_call.1} parent=1 // pred_region
      %s14 = ssub.s32 256, 256
      %15 = vsyncadd [#allocation4], %s14
      %s16 = sshll.u32 [#allocation3], 4
      %s17 = int_to_ptr.vmem [resolvable:$true] %s16
      %22 = dma.hbm_to_vmem [thread:$0]  %s0, 256, %s17, [#allocation4], 64, 64, 4
    $region5: #{tpu_custom_call.1} parent=1 // pred_fallthru
      _
    // Predicated region
    $region6: #{tpu_custom_call.1} parent=1 // pred_check
      _
    $region7: #{tpu_custom_call.1} parent=1 // pred_check_branch
      %24 = sbr.rel (0) target = $region9
    $region8: #{tpu_custom_call.1} parent=1 // pred_region
      %s26 = ssub.s32 4096, 4096
      %27 = vsyncadd [#allocation7], %s26
      %s28 = sshll.u32 [#allocation6], 4
      %s29 = int_to_ptr.vmem [resolvable:$true] %s28
      %34 = dma.hbm_to_vmem [thread:$0]  %s1, 4096, %s29, [#allocation7], 64, 64, 4
    $region9: #{tpu_custom_call.1} parent=1 // pred_fallthru
      _
    // Predicated region
    $region10: #{tpu_custom_call.1} parent=1 // pred_check
      _
    $region11: #{tpu_custom_call.1} parent=1 // pred_check_branch
      %36 = sbr.rel (0) target = $region13
    $region12: #{tpu_custom_call.1} parent=1 // pred_region
      _
    $region13: #{tpu_custom_call.1} parent=1 // pred_fallthru
      _
    // Predicated region
    $region14: #{tpu_custom_call.1} parent=1 // pred_check
      _
    $region15: #{tpu_custom_call.1} parent=1 // pred_check_branch
      %38 = sbr.rel (0) target = $region17
    $region16: #{tpu_custom_call.1} parent=1 // pred_region
      %39 = dma.done [#allocation4], 256
    $region17: #{tpu_custom_call.1} parent=1 // pred_fallthru
      _
    // Predicated region
    $region18: #{tpu_custom_call.1} parent=1 // pred_check
      _
    $region19: #{tpu_custom_call.1} parent=1 // pred_check_branch
      %41 = sbr.rel (0) target = $region21
    $region20: #{tpu_custom_call.1} parent=1 // pred_region
      %42 = dma.done [#allocation7], 4096
    $region21: #{tpu_custom_call.1} parent=1 // pred_fallthru
      _
    %p44 = scmp.eq.s32.totalorder 0, 0
    // Predicated region
    $region22: #{tpu_custom_call.1} parent=1 // pred_check
      %p45 = pneg %p44
    $region23: #{tpu_custom_call.1} parent=1 // pred_check_branch
      %47 = sbr.rel (%p45) target = $region25
    $region24: #{tpu_custom_call.1} parent=1 // pred_region
      %48 = vst [vmem:[#allocation2] sm:$0xff] 0.0
      %49 = vst [vmem:[#allocation2 + $0x8] sm:$0xff] 0.0
      %50 = vst [vmem:[#allocation2 + $0x10] sm:$0xff] 0.0
      %51 = vst [vmem:[#allocation2 + $0x18] sm:$0xff] 0.0
    $region25: #{tpu_custom_call.1} parent=1 // pred_fallthru
      _
    %v52 = vld [vmem:[#allocation2] sm:$0xff]
    %v53 = vld [vmem:[#allocation2 + $0x8] sm:$0xff]
    %v54 = vld [vmem:[#allocation2 + $0x10] sm:$0xff]
    %v55 = vld [vmem:[#allocation2 + $0x18] sm:$0xff]
    %v56 = vld [vmem:[#allocation3] sm:$0xf]
    %v57 = vld [vmem:[#allocation3 + $0x4] sm:$0xf]
    %v58 = vld [vmem:[#allocation3 + $0x8] sm:$0xf]
    %v59 = vld [vmem:[#allocation3 + $0xc] sm:$0xf]
    %v60 = vld [vmem:[#allocation6] sm:$0xf]
    %v61 = vld [vmem:[#allocation6 + $0x4] sm:$0xf]
    %v62 = vld [vmem:[#allocation6 + $0x8] sm:$0xf]
    %v63 = vld [vmem:[#allocation6 + $0xc] sm:$0xf]
    %v64 = vld [vmem:[#allocation6 + $0x10] sm:$0xf]
    %v65 = vld [vmem:[#allocation6 + $0x14] sm:$0xf]
    %v66 = vld [vmem:[#allocation6 + $0x18] sm:$0xf]
    %v67 = vld [vmem:[#allocation6 + $0x1c] sm:$0xf]
    %v68 = vld [vmem:[#allocation6 + $0x20] sm:$0xf]
    %v69 = vld [vmem:[#allocation6 + $0x24] sm:$0xf]
    %v70 = vld [vmem:[#allocation6 + $0x28] sm:$0xf]
    %v71 = vld [vmem:[#allocation6 + $0x2c] sm:$0xf]
    %v72 = vld [vmem:[#allocation6 + $0x30] sm:$0xf]
    %v73 = vld [vmem:[#allocation6 + $0x34] sm:$0xf]
    %v74 = vld [vmem:[#allocation6 + $0x38] sm:$0xf]
    %v75 = vld [vmem:[#allocation6 + $0x3c] sm:$0xf]
    %v76 = vld [vmem:[#allocation6 + $0x40] sm:$0xf]
    %v77 = vld [vmem:[#allocation6 + $0x44] sm:$0xf]
    %v78 = vld [vmem:[#allocation6 + $0x48] sm:$0xf]
    %v79 = vld [vmem:[#allocation6 + $0x4c] sm:$0xf]
    %v80 = vld [vmem:[#allocation6 + $0x50] sm:$0xf]
    %v81 = vld [vmem:[#allocation6 + $0x54] sm:$0xf]
    %v82 = vld [vmem:[#allocation6 + $0x58] sm:$0xf]
    %v83 = vld [vmem:[#allocation6 + $0x5c] sm:$0xf]
    %v84 = vld [vmem:[#allocation6 + $0x60] sm:$0xf]
    %v85 = vld [vmem:[#allocation6 + $0x64] sm:$0xf]
    %v86 = vld [vmem:[#allocation6 + $0x68] sm:$0xf]
    %v87 = vld [vmem:[#allocation6 + $0x6c] sm:$0xf]
    %v88 = vld [vmem:[#allocation6 + $0x70] sm:$0xf]
    %v89 = vld [vmem:[#allocation6 + $0x74] sm:$0xf]
    %v90 = vld [vmem:[#allocation6 + $0x78] sm:$0xf]
    %v91 = vld [vmem:[#allocation6 + $0x7c] sm:$0xf]
    %v92 = vld [vmem:[#allocation6 + $0x80] sm:$0xf]
    %v93 = vld [vmem:[#allocation6 + $0x84] sm:$0xf]
    %v94 = vld [vmem:[#allocation6 + $0x88] sm:$0xf]
    %v95 = vld [vmem:[#allocation6 + $0x8c] sm:$0xf]
    %v96 = vld [vmem:[#allocation6 + $0x90] sm:$0xf]
    %v97 = vld [vmem:[#allocation6 + $0x94] sm:$0xf]
    %v98 = vld [vmem:[#allocation6 + $0x98] sm:$0xf]
    %v99 = vld [vmem:[#allocation6 + $0x9c] sm:$0xf]
    %v100 = vld [vmem:[#allocation6 + $0xa0] sm:$0xf]
    %v101 = vld [vmem:[#allocation6 + $0xa4] sm:$0xf]
    %v102 = vld [vmem:[#allocation6 + $0xa8] sm:$0xf]
    %v103 = vld [vmem:[#allocation6 + $0xac] sm:$0xf]
    %v104 = vld [vmem:[#allocation6 + $0xb0] sm:$0xf]
    %v105 = vld [vmem:[#allocation6 + $0xb4] sm:$0xf]
    %v106 = vld [vmem:[#allocation6 + $0xb8] sm:$0xf]
    %v107 = vld [vmem:[#allocation6 + $0xbc] sm:$0xf]
    %v108 = vld [vmem:[#allocation6 + $0xc0] sm:$0xf]
    %v109 = vld [vmem:[#allocation6 + $0xc4] sm:$0xf]
    %v110 = vld [vmem:[#allocation6 + $0xc8] sm:$0xf]
    %v111 = vld [vmem:[#allocation6 + $0xcc] sm:$0xf]
    %v112 = vld [vmem:[#allocation6 + $0xd0] sm:$0xf]
    %v113 = vld [vmem:[#allocation6 + $0xd4] sm:$0xf]
    %v114 = vld [vmem:[#allocation6 + $0xd8] sm:$0xf]
    %v115 = vld [vmem:[#allocation6 + $0xdc] sm:$0xf]
    %v116 = vld [vmem:[#allocation6 + $0xe0] sm:$0xf]
    %v117 = vld [vmem:[#allocation6 + $0xe4] sm:$0xf]
    %v118 = vld [vmem:[#allocation6 + $0xe8] sm:$0xf]
    %v119 = vld [vmem:[#allocation6 + $0xec] sm:$0xf]
    %v120 = vld [vmem:[#allocation6 + $0xf0] sm:$0xf]
    %v121 = vld [vmem:[#allocation6 + $0xf4] sm:$0xf]
    %v122 = vld [vmem:[#allocation6 + $0xf8] sm:$0xf]
    %v123 = vld [vmem:[#allocation6 + $0xfc] sm:$0xf]
    %v140 = vunpack.c.l.b16 %v60
    %v141 = vunpack.c.l.b16 %v61
    %v142 = vunpack.c.l.b16 %v62
    %v143 = vunpack.c.l.b16 %v63
    %v144 = vunpack.c.l.b16 %v64
    %v145 = vunpack.c.l.b16 %v65
    %v146 = vunpack.c.l.b16 %v66
    %v147 = vunpack.c.l.b16 %v67
    %v148 = vunpack.c.l.b16 %v68
    %v149 = vunpack.c.l.b16 %v69
    %v150 = vunpack.c.l.b16 %v70
    %v151 = vunpack.c.l.b16 %v71
    %v152 = vunpack.c.l.b16 %v72
    %v153 = vunpack.c.l.b16 %v73
    %v154 = vunpack.c.l.b16 %v74
    %v155 = vunpack.c.l.b16 %v75
    %v156 = vpack.c.b16 %v141, %v140
    %v157 = vpack.c.b16 %v143, %v142
    %v158 = vpack.c.b16 %v145, %v144
    %v159 = vpack.c.b16 %v147, %v146
    %v160 = vpack.c.b16 %v149, %v148
    %v161 = vpack.c.b16 %v151, %v150
    %v162 = vpack.c.b16 %v153, %v152
    %v163 = vpack.c.b16 %v155, %v154
    %172 = vmatprep.subr.bf16.mxu0 0
    %173 = vmatpush1.bf16.msra.mxu0 %v156
    %174 = vmatprep.subr.bf16.mxu0 0
    %175 = vmatpush1.bf16.msra.mxu0 %v157
    %176 = vmatprep.subr.bf16.mxu0 0
    %177 = vmatpush1.bf16.msra.mxu0 %v158
    %178 = vmatprep.subr.bf16.mxu0 0
    %179 = vmatpush1.bf16.msra.mxu0 %v159
    %180 = vmatprep.subr.bf16.mxu0 0
    %181 = vmatpush1.bf16.msra.mxu0 %v160
    %182 = vmatprep.subr.bf16.mxu0 0
    %183 = vmatpush1.bf16.msra.mxu0 %v161
    %184 = vmatprep.subr.bf16.mxu0 0
    %185 = vmatpush1.bf16.msra.mxu0 %v162
    %186 = vmatprep.subr.bf16.mxu0 0
    %187 = vmatpush1.bf16.msra.mxu0 %v163
    %188 = vmatprep.subr.bf16.mxu0 0
    %189 = vmatpush1.bf16.msra.mxu0 0
    %190 = vmatprep.subr.bf16.mxu0 0
    %191 = vmatpush1.bf16.msra.mxu0 0
    %192 = vmatprep.subr.bf16.mxu0 0
    %193 = vmatpush1.bf16.msra.mxu0 0
    %194 = vmatprep.subr.bf16.mxu0 0
    %195 = vmatpush1.bf16.msra.mxu0 0
    %196 = vmatprep.subr.bf16.mxu0 0
    %197 = vmatpush1.bf16.msra.mxu0 0
    %198 = vmatprep.subr.bf16.mxu0 0
    %199 = vmatpush1.bf16.msra.mxu0 0
    %200 = vmatprep.subr.bf16.mxu0 0
    %201 = vmatpush1.bf16.msra.mxu0 0
    %202 = vmatprep.subr.bf16.mxu0 0
    %203 = vmatpush1.bf16.msra.mxu0 0
    %204 = vmatprep.mubr.bf16.mxu0 0
    %205 = vmatmul.mubr.bf16.gmra.mrb[0].mxu0 %v56
    %v206 = vpop.f32.mrb[0].mxu0
    %v207 = vadd.f32 0.0, %v206
    %v208 = vpop.f32.mrb[0].mxu0
    %v209 = vpop.f32.mrb[0].mxu0
    %v210 = vpop.f32.mrb[0].mxu0
    %211 = vdwg.mxu0
    %v228 = vunpack.c.l.b16 %v76
    %v229 = vunpack.c.l.b16 %v77
    %v230 = vunpack.c.l.b16 %v78
    %v231 = vunpack.c.l.b16 %v79
    %v232 = vunpack.c.l.b16 %v80
    %v233 = vunpack.c.l.b16 %v81
    %v234 = vunpack.c.l.b16 %v82
    %v235 = vunpack.c.l.b16 %v83
    %v236 = vunpack.c.l.b16 %v84
    %v237 = vunpack.c.l.b16 %v85
    %v238 = vunpack.c.l.b16 %v86
    %v239 = vunpack.c.l.b16 %v87
    %v240 = vunpack.c.l.b16 %v88
    %v241 = vunpack.c.l.b16 %v89
    %v242 = vunpack.c.l.b16 %v90
    %v243 = vunpack.c.l.b16 %v91
    %v244 = vpack.c.b16 %v229, %v228
    %v245 = vpack.c.b16 %v231, %v230
    %v246 = vpack.c.b16 %v233, %v232
    %v247 = vpack.c.b16 %v235, %v234
    %v248 = vpack.c.b16 %v237, %v236
    %v249 = vpack.c.b16 %v239, %v238
    %v250 = vpack.c.b16 %v241, %v240
    %v251 = vpack.c.b16 %v243, %v242
    %260 = vmatprep.subr.bf16.mxu0 0
    %261 = vmatpush1.bf16.msra.mxu0 %v244
    %262 = vmatprep.subr.bf16.mxu0 0
    %263 = vmatpush1.bf16.msra.mxu0 %v245
    %264 = vmatprep.subr.bf16.mxu0 0
    %265 = vmatpush1.bf16.msra.mxu0 %v246
    %266 = vmatprep.subr.bf16.mxu0 0
    %267 = vmatpush1.bf16.msra.mxu0 %v247
    %268 = vmatprep.subr.bf16.mxu0 0
    %269 = vmatpush1.bf16.msra.mxu0 %v248
    %270 = vmatprep.subr.bf16.mxu0 0
    %271 = vmatpush1.bf16.msra.mxu0 %v249
    %272 = vmatprep.subr.bf16.mxu0 0
    %273 = vmatpush1.bf16.msra.mxu0 %v250
    %274 = vmatprep.subr.bf16.mxu0 0
    %275 = vmatpush1.bf16.msra.mxu0 %v251
    %276 = vmatprep.subr.bf16.mxu0 0
    %277 = vmatpush1.bf16.msra.mxu0 0
    %278 = vmatprep.subr.bf16.mxu0 0
    %279 = vmatpush1.bf16.msra.mxu0 0
    %280 = vmatprep.subr.bf16.mxu0 0
    %281 = vmatpush1.bf16.msra.mxu0 0
    %282 = vmatprep.subr.bf16.mxu0 0
    %283 = vmatpush1.bf16.msra.mxu0 0
    %284 = vmatprep.subr.bf16.mxu0 0
    %285 = vmatpush1.bf16.msra.mxu0 0
    %286 = vmatprep.subr.bf16.mxu0 0
    %287 = vmatpush1.bf16.msra.mxu0 0
    %288 = vmatprep.subr.bf16.mxu0 0
    %289 = vmatpush1.bf16.msra.mxu0 0
    %290 = vmatprep.subr.bf16.mxu0 0
    %291 = vmatpush1.bf16.msra.mxu0 0
    %292 = vmatprep.mubr.bf16.mxu0 0
    %293 = vmatmul.mubr.bf16.gmra.mrb[0].mxu0 %v57
    %v294 = vpop.f32.mrb[0].mxu0
    %v295 = vadd.f32 0.0, %v294
    %v296 = vpop.f32.mrb[0].mxu0
    %v297 = vpop.f32.mrb[0].mxu0
    %v298 = vpop.f32.mrb[0].mxu0
    %299 = vdwg.mxu0
    %v316 = vunpack.c.l.b16 %v92
    %v317 = vunpack.c.l.b16 %v93
    %v318 = vunpack.c.l.b16 %v94
    %v319 = vunpack.c.l.b16 %v95
    %v320 = vunpack.c.l.b16 %v96
    %v321 = vunpack.c.l.b16 %v97
    %v322 = vunpack.c.l.b16 %v98
    %v323 = vunpack.c.l.b16 %v99
    %v324 = vunpack.c.l.b16 %v100
    %v325 = vunpack.c.l.b16 %v101
    %v326 = vunpack.c.l.b16 %v102
    %v327 = vunpack.c.l.b16 %v103
    %v328 = vunpack.c.l.b16 %v104
    %v329 = vunpack.c.l.b16 %v105
    %v330 = vunpack.c.l.b16 %v106
    %v331 = vunpack.c.l.b16 %v107
    %v332 = vpack.c.b16 %v317, %v316
    %v333 = vpack.c.b16 %v319, %v318
    %v334 = vpack.c.b16 %v321, %v320
    %v335 = vpack.c.b16 %v323, %v322
    %v336 = vpack.c.b16 %v325, %v324
    %v337 = vpack.c.b16 %v327, %v326
    %v338 = vpack.c.b16 %v329, %v328
    %v339 = vpack.c.b16 %v331, %v330
    %348 = vmatprep.subr.bf16.mxu0 0
    %349 = vmatpush1.bf16.msra.mxu0 %v332
    %350 = vmatprep.subr.bf16.mxu0 0
    %351 = vmatpush1.bf16.msra.mxu0 %v333
    %352 = vmatprep.subr.bf16.mxu0 0
    %353 = vmatpush1.bf16.msra.mxu0 %v334
    %354 = vmatprep.subr.bf16.mxu0 0
    %355 = vmatpush1.bf16.msra.mxu0 %v335
    %356 = vmatprep.subr.bf16.mxu0 0
    %357 = vmatpush1.bf16.msra.mxu0 %v336
    %358 = vmatprep.subr.bf16.mxu0 0
    %359 = vmatpush1.bf16.msra.mxu0 %v337
    %360 = vmatprep.subr.bf16.mxu0 0
    %361 = vmatpush1.bf16.msra.mxu0 %v338
    %362 = vmatprep.subr.bf16.mxu0 0
    %363 = vmatpush1.bf16.msra.mxu0 %v339
    %364 = vmatprep.subr.bf16.mxu0 0
    %365 = vmatpush1.bf16.msra.mxu0 0
    %366 = vmatprep.subr.bf16.mxu0 0
    %367 = vmatpush1.bf16.msra.mxu0 0
    %368 = vmatprep.subr.bf16.mxu0 0
    %369 = vmatpush1.bf16.msra.mxu0 0
    %370 = vmatprep.subr.bf16.mxu0 0
    %371 = vmatpush1.bf16.msra.mxu0 0
    %372 = vmatprep.subr.bf16.mxu0 0
    %373 = vmatpush1.bf16.msra.mxu0 0
    %374 = vmatprep.subr.bf16.mxu0 0
    %375 = vmatpush1.bf16.msra.mxu0 0
    %376 = vmatprep.subr.bf16.mxu0 0
    %377 = vmatpush1.bf16.msra.mxu0 0
    %378 = vmatprep.subr.bf16.mxu0 0
    %379 = vmatpush1.bf16.msra.mxu0 0
    %380 = vmatprep.mubr.bf16.mxu0 0
    %381 = vmatmul.mubr.bf16.gmra.mrb[0].mxu0 %v58
    %v382 = vpop.f32.mrb[0].mxu0
    %v383 = vadd.f32 0.0, %v382
    %v384 = vpop.f32.mrb[0].mxu0
    %v385 = vpop.f32.mrb[0].mxu0
    %v386 = vpop.f32.mrb[0].mxu0
    %387 = vdwg.mxu0
    %v404 = vunpack.c.l.b16 %v108
    %v405 = vunpack.c.l.b16 %v109
    %v406 = vunpack.c.l.b16 %v110
    %v407 = vunpack.c.l.b16 %v111
    %v408 = vunpack.c.l.b16 %v112
    %v409 = vunpack.c.l.b16 %v113
    %v410 = vunpack.c.l.b16 %v114
    %v411 = vunpack.c.l.b16 %v115
    %v412 = vunpack.c.l.b16 %v116
    %v413 = vunpack.c.l.b16 %v117
    %v414 = vunpack.c.l.b16 %v118
    %v415 = vunpack.c.l.b16 %v119
    %v416 = vunpack.c.l.b16 %v120
    %v417 = vunpack.c.l.b16 %v121
    %v418 = vunpack.c.l.b16 %v122
    %v419 = vunpack.c.l.b16 %v123
    %v420 = vpack.c.b16 %v405, %v404
    %v421 = vpack.c.b16 %v407, %v406
    %v422 = vpack.c.b16 %v409, %v408
    %v423 = vpack.c.b16 %v411, %v410
    %v424 = vpack.c.b16 %v413, %v412
    %v425 = vpack.c.b16 %v415, %v414
    %v426 = vpack.c.b16 %v417, %v416
    %v427 = vpack.c.b16 %v419, %v418
    %436 = vmatprep.subr.bf16.mxu0 0
    %437 = vmatpush1.bf16.msra.mxu0 %v420
    %438 = vmatprep.subr.bf16.mxu0 0
    %439 = vmatpush1.bf16.msra.mxu0 %v421
    %440 = vmatprep.subr.bf16.mxu0 0
    %441 = vmatpush1.bf16.msra.mxu0 %v422
    %442 = vmatprep.subr.bf16.mxu0 0
    %443 = vmatpush1.bf16.msra.mxu0 %v423
    %444 = vmatprep.subr.bf16.mxu0 0
    %445 = vmatpush1.bf16.msra.mxu0 %v424
    %446 = vmatprep.subr.bf16.mxu0 0
    %447 = vmatpush1.bf16.msra.mxu0 %v425
    %448 = vmatprep.subr.bf16.mxu0 0
    %449 = vmatpush1.bf16.msra.mxu0 %v426
    %450 = vmatprep.subr.bf16.mxu0 0
    %451 = vmatpush1.bf16.msra.mxu0 %v427
    %452 = vmatprep.subr.bf16.mxu0 0
    %453 = vmatpush1.bf16.msra.mxu0 0
    %454 = vmatprep.subr.bf16.mxu0 0
    %455 = vmatpush1.bf16.msra.mxu0 0
    %456 = vmatprep.subr.bf16.mxu0 0
    %457 = vmatpush1.bf16.msra.mxu0 0
    %458 = vmatprep.subr.bf16.mxu0 0
    %459 = vmatpush1.bf16.msra.mxu0 0
    %460 = vmatprep.subr.bf16.mxu0 0
    %461 = vmatpush1.bf16.msra.mxu0 0
    %462 = vmatprep.subr.bf16.mxu0 0
    %463 = vmatpush1.bf16.msra.mxu0 0
    %464 = vmatprep.subr.bf16.mxu0 0
    %465 = vmatpush1.bf16.msra.mxu0 0
    %466 = vmatprep.subr.bf16.mxu0 0
    %467 = vmatpush1.bf16.msra.mxu0 0
    %468 = vmatprep.mubr.bf16.mxu0 0
    %469 = vmatmul.mubr.bf16.gmra.mrb[0].mxu0 %v59
    %v470 = vpop.f32.mrb[0].mxu0
    %v471 = vadd.f32 0.0, %v470
    %v472 = vpop.f32.mrb[0].mxu0
    %v473 = vpop.f32.mrb[0].mxu0
    %v474 = vpop.f32.mrb[0].mxu0
    %475 = vdwg.mxu0
    %v476 = vadd.f32 %v52, %v207
    %v477 = vadd.f32 %v53, %v295
    %v478 = vadd.f32 %v54, %v383
    %v479 = vadd.f32 %v55, %v471
    %480 = vst [vmem:[#allocation2] sm:$0xff] %v476
    %481 = vst [vmem:[#allocation2 + $0x8] sm:$0xff] %v477
    %482 = vst [vmem:[#allocation2 + $0x10] sm:$0xff] %v478
    %483 = vst [vmem:[#allocation2 + $0x18] sm:$0xff] %v479
    // Predicated region
    $region26: #{tpu_custom_call.1} parent=1 // pred_check
      %p484 = pneg %p44
    $region27: #{tpu_custom_call.1} parent=1 // pred_check_branch
      %486 = sbr.rel (%p484) target = $region29
    $region28: #{tpu_custom_call.1} parent=1 // pred_region
      %v487 = vld [vmem:[#allocation2] sm:$0xff]
      %v488 = vld [vmem:[#allocation2 + $0x8] sm:$0xff]
      %v489 = vld [vmem:[#allocation2 + $0x10] sm:$0xff]
      %v490 = vld [vmem:[#allocation2 + $0x18] sm:$0xff]
      %v491 = vld [vmem:[%s2] sm:$0x1]
      %v492 = vld [vmem:[%s2 + $0x1] sm:$0x1]
      %v493 = vld [vmem:[%s2 + $0x2] sm:$0x1]
      %v494 = vld [vmem:[%s2 + $0x3] sm:$0x1]
      %v499 = vlaneseq
      %v500 = vshrl.u32 %v499, 7
      %v501 = vsub.s32 0, %v500
      %v502 = vrot.slane %v491, %v501
      %v503 = vlaneseq
      %v504 = vshrl.u32 %v503, 7
      %v505 = vsub.s32 0, %v504
      %v506 = vrot.slane %v492, %v505
      %v507 = vlaneseq
      %v508 = vshrl.u32 %v507, 7
      %v509 = vsub.s32 0, %v508
      %v510 = vrot.slane %v493, %v509
      %v511 = vlaneseq
      %v512 = vshrl.u32 %v511, 7
      %v513 = vsub.s32 0, %v512
      %v514 = vrot.slane %v494, %v513
      %v519 = vadd.f32 %v487, %v502
      %v520 = vadd.f32 %v488, %v506
      %v521 = vadd.f32 %v489, %v510
      %v522 = vadd.f32 %v490, %v514
      %523 = vst [vmem:[#allocation8] sm:$0xff] %v519
      %524 = vst [vmem:[#allocation8 + $0x8] sm:$0xff] %v520
      %525 = vst [vmem:[#allocation8 + $0x10] sm:$0xff] %v521
      %526 = vst [vmem:[#allocation8 + $0x18] sm:$0xff] %v522
    $region29: #{tpu_custom_call.1} parent=1 // pred_fallthru
      _
    // Predicated region
    $region30: #{tpu_custom_call.1} parent=1 // pred_check
      _
    $region31: #{tpu_custom_call.1} parent=1 // pred_check_branch
      %528 = sbr.rel (0) target = $region33
    $region32: #{tpu_custom_call.1} parent=1 // pred_region
      %s530 = ssub.s32 512, 512
      %531 = vsyncadd [#allocation5], %s530
      %s532 = sshll.u32 [#allocation8], 4
      %s533 = int_to_ptr.vmem [resolvable:$true] %s532
      %538 = dma.vmem_to_hbm [thread:$0]  %s533, 512, %s3, [#allocation5], 128, 128, 8
    $region33: #{tpu_custom_call.1} parent=1 // pred_fallthru
      _
    // Predicated region
    $region34: #{tpu_custom_call.1} parent=1 // pred_check
      _
    $region35: #{tpu_custom_call.1} parent=1 // pred_check_branch
      %540 = sbr.rel (0) target = $region37
    $region36: #{tpu_custom_call.1} parent=1 // pred_region
      %541 = dma.done [#allocation5], 512
    $region37: #{tpu_custom_call.1} parent=1 // pred_fallthru
      _
    %542 = vsyncpa [#allocation4], 1
    %543 = vsyncpa [#allocation7], 1
    %544 = vsyncpa [#allocation5], 1

</llo_original>
